<compile_context>
chip_gen: v6e
topology: v6e:2x2x1
jax: 0.10.0
libtpu: 0.0.40
codegen_flags: <defaults>
</compile_context>

<pallas_src>
import jax
import jax.numpy as jnp
from jax.experimental import pallas as pl
from jax.experimental.pallas import tpu as pltpu

SUBLANE = 8


def _round_up(n, m):
    return ((n + m - 1) // m) * m


def decoder_kernel(x_ref, w1_ref, b1_ref, w2_ref, b2_ref, w3_ref, b3_ref, out_ref):
    # x arrives as f32; cast to bf16 in-kernel for the MXU (free VPU work).
    x = x_ref[...].astype(jnp.bfloat16)
    # fc1 + relu  (bf16 MXU feeds, f32 accumulate, f32 elementwise)
    h1 = jnp.dot(x, w1_ref[...], preferred_element_type=jnp.float32)
    h1 = jnp.maximum(h1 + b1_ref[...], 0.0)
    # fc2 + relu
    h2 = jnp.dot(h1.astype(jnp.bfloat16), w2_ref[...],
                 preferred_element_type=jnp.float32)
    h2 = jnp.maximum(h2 + b2_ref[...], 0.0)
    # fc3 + sigmoid
    z = jnp.dot(h2.astype(jnp.bfloat16), w3_ref[...],
                preferred_element_type=jnp.float32)
    z = z + b3_ref[...]
    # sigmoid(z) = 1 / (1 + exp(-z)); exp and approx reciprocal both on EUP slot.
    out_ref[...] = pl.reciprocal(1.0 + jnp.exp(-z), approx=True).astype(out_ref.dtype)


def prepare_params(params):
    """One-time weight prep: bf16 MXU operands (biases stay f32). Call once,
    reuse across forward calls so per-call dispatch is just the pallas_call."""
    return {
        "w1": params["w1"].astype(jnp.bfloat16), "b1": params["b1"],
        "w2": params["w2"].astype(jnp.bfloat16), "b2": params["b2"],
        "w3": params["w3"].astype(jnp.bfloat16), "b3": params["b3"],
    }


def decoder_forward(x, prepared, *, tile_b=2048, out_dtype=jnp.float32):
    """x: [batch, latent] f32; prepared: output of prepare_params()."""
    w1, b1 = prepared["w1"], prepared["b1"]
    w2, b2 = prepared["w2"], prepared["b2"]
    w3, b3 = prepared["w3"], prepared["b3"]

    batch, latent = x.shape
    hidden = w1.shape[1]
    output_size = w3.shape[1]

    # --- Batch: pad only to a sublane multiple (8); no tile-multiple padding.
    batch_pad = _round_up(batch, SUBLANE)
    if batch_pad != batch:
        x = jnp.pad(x, ((0, batch_pad - batch), (0, 0)))

    # --- Tile selection: big tiles to amortize grid-step overhead, but ensure
    #     >=2 programs for large batches so v7x's 2 TensorCores both get work.
    tile_b = min(tile_b, batch_pad)
    if batch_pad >= 512:
        tile_b = min(tile_b, _round_up(pl.cdiv(batch_pad, 2), SUBLANE))
    grid = (pl.cdiv(batch_pad, tile_b),)

    def resident(a):  # full block, constant index map -> loaded into VMEM once
        return pl.BlockSpec(a.shape, lambda i: (0, 0))

    out = pl.pallas_call(
        decoder_kernel,
        out_shape=jax.ShapeDtypeStruct((batch_pad, output_size), out_dtype),
        grid=grid,
        in_specs=[
            pl.BlockSpec((tile_b, latent), lambda i: (i, 0)),   # x: tiled on batch
            resident(w1), resident(b1),
            resident(w2), resident(b2),
            resident(w3), resident(b3),
        ],
        out_specs=pl.BlockSpec((tile_b, output_size), lambda i: (i, 0)),
        compiler_params=pltpu.CompilerParams(
            dimension_semantics=("parallel",),   # v7x: shard batch tiles over 2 TCs
        ),
    )(x, w1, b1, w2, b2, w3, b3)

    return out if batch_pad == batch else out[:batch]


def init_params(key, latent_size, hidden_size, output_size):
    """Deterministic init mirroring nn.Linear shapes (weights stored transposed)."""
    ks = jax.random.split(key, 6)

    def linear(kw, kb, fan_in, fan_out):
        bound = 1.0 / jnp.sqrt(fan_in)
        w = jax.random.uniform(kw, (fan_in, fan_out), jnp.float32, -bound, bound)
        b = jax.random.uniform(kb, (1, fan_out), jnp.float32, -bound, bound)
        return w, b

    w1, b1 = linear(ks[0], ks[1], latent_size, hidden_size)
    w2, b2 = linear(ks[2], ks[3], hidden_size, hidden_size)
    w3, b3 = linear(ks[4], ks[5], hidden_size, output_size)
    return {"w1": w1, "b1": b1, "w2": w2, "b2": b2, "w3": w3, "b3": b3}


def decoder_ref_bf16(x, params):
    """Pure-JAX reference matching the kernel's bf16-MXU / f32-accumulate path."""
    bf = jnp.bfloat16
    h = jnp.dot(x.astype(bf), params["w1"].astype(bf),
                preferred_element_type=jnp.float32)
    h = jnp.maximum(h + params["b1"], 0.0)
    h = jnp.dot(h.astype(bf), params["w2"].astype(bf),
                preferred_element_type=jnp.float32)
    h = jnp.maximum(h + params["b2"], 0.0)
    z = jnp.dot(h.astype(bf), params["w3"].astype(bf),
                preferred_element_type=jnp.float32) + params["b3"]
    return jax.nn.sigmoid(z)


def decoder_ref_f32(x, params):
    """Full-precision reference (loose sanity check only)."""
    h = jnp.maximum(x @ params["w1"] + params["b1"], 0.0)
    h = jnp.maximum(h @ params["w2"] + params["b2"], 0.0)
    return jax.nn.sigmoid(h @ params["w3"] + params["b3"])


if __name__ == "__main__":
    latent_size = 6
    hidden_size = 32
    output_size = 64
    batch = 8

    key = jax.random.PRNGKey(0)
    k_params, k_x = jax.random.split(key)
    params = init_params(k_params, latent_size, hidden_size, output_size)
    prepared = prepare_params(params)   # one-time bf16 weight prep
    x = jax.random.normal(k_x, (batch, latent_size), jnp.float32)

    out = decoder_forward(x, prepared)
    out = jax.block_until_ready(out)

    assert out.shape == (batch, output_size), out.shape

    ref_bf = decoder_ref_bf16(x, params)
    assert jnp.allclose(out, ref_bf, atol=5e-3, rtol=5e-3), \
        "mismatch vs bf16-MXU JAX reference"

    ref_f32 = decoder_ref_f32(x, params)
    assert jnp.allclose(out, ref_f32, atol=5e-2), \
        "mismatch vs f32 JAX reference (beyond bf16 tolerance)"

    print("KERNEL_OK")
</pallas_src>

<mosaic_0001>
module attributes {stable_mosaic.version = 11 : i64} {
  func.func @decoder_kernel(%arg0: i32, %arg1: memref<8x6xf32, #tpu.memory_space<vmem>>, %arg2: memref<6x32xbf16, #tpu.memory_space<vmem>>, %arg3: memref<1x32xf32, #tpu.memory_space<vmem>>, %arg4: memref<32x32xbf16, #tpu.memory_space<vmem>>, %arg5: memref<1x32xf32, #tpu.memory_space<vmem>>, %arg6: memref<32x64xbf16, #tpu.memory_space<vmem>>, %arg7: memref<1x64xf32, #tpu.memory_space<vmem>>, %arg8: memref<8x64xf32, #tpu.memory_space<vmem>>) attributes {dimension_semantics = [#tpu.dimension_semantics<parallel>], iteration_bounds = array<i64: 1>, scalar_prefetch = 0 : i64, scratch_operands = 0 : i64, tpu.core_type = #tpu.core_type<tc>, window_params = [{transform_indices = @transform_0, window_bounds = array<i64: 8, 6>}, {pipeline_mode = #tpu.pipeline_mode<synchronous>, transform_indices = @transform_1, window_bounds = array<i64: 6, 32>}, {pipeline_mode = #tpu.pipeline_mode<synchronous>, transform_indices = @transform_2, window_bounds = array<i64: 1, 32>}, {pipeline_mode = #tpu.pipeline_mode<synchronous>, transform_indices = @transform_3, window_bounds = array<i64: 32, 32>}, {pipeline_mode = #tpu.pipeline_mode<synchronous>, transform_indices = @transform_4, window_bounds = array<i64: 1, 32>}, {pipeline_mode = #tpu.pipeline_mode<synchronous>, transform_indices = @transform_5, window_bounds = array<i64: 32, 64>}, {pipeline_mode = #tpu.pipeline_mode<synchronous>, transform_indices = @transform_6, window_bounds = array<i64: 1, 64>}, {transform_indices = @transform_7, window_bounds = array<i64: 8, 64>}]} {
    %c0 = arith.constant 0 : index
    %c0_0 = arith.constant 0 : index
    %0 = vector.load %arg1[%c0, %c0_0] : memref<8x6xf32, #tpu.memory_space<vmem>>, vector<8x6xf32>
    %1 = arith.truncf %0 : vector<8x6xf32> to vector<8x6xbf16>
    %c0_1 = arith.constant 0 : index
    %c0_2 = arith.constant 0 : index
    %2 = vector.load %arg2[%c0_1, %c0_2] : memref<6x32xbf16, #tpu.memory_space<vmem>>, vector<6x32xbf16>
    %cst = arith.constant dense<0.000000e+00> : vector<8x32xf32>
    %3 = tpu.matmul %1, %2, %cst {dimension_numbers = #tpu.dot_dimension_numbers<[1], [0], [0], [1], [0, 0, 1, 1], [], []>} : vector<8x6xbf16>, vector<6x32xbf16>, vector<8x32xf32> -> vector<8x32xf32>
    %c0_3 = arith.constant 0 : index
    %c0_4 = arith.constant 0 : index
    %4 = vector.load %arg3[%c0_3, %c0_4] : memref<1x32xf32, #tpu.memory_space<vmem>>, vector<1x32xf32>
    %5 = vector.broadcast %4 : vector<1x32xf32> to vector<8x32xf32>
    %6 = arith.addf %3, %5 : vector<8x32xf32>
    %cst_5 = arith.constant 0.000000e+00 : f32
    %7 = vector.broadcast %cst_5 : f32 to vector<8x32xf32>
    %8 = arith.maximumf %6, %7 : vector<8x32xf32>
    %9 = arith.truncf %8 : vector<8x32xf32> to vector<8x32xbf16>
    %c0_6 = arith.constant 0 : index
    %c0_7 = arith.constant 0 : index
    %10 = vector.load %arg4[%c0_6, %c0_7] : memref<32x32xbf16, #tpu.memory_space<vmem>>, vector<32x32xbf16>
    %cst_8 = arith.constant dense<0.000000e+00> : vector<8x32xf32>
    %11 = tpu.matmul %9, %10, %cst_8 {dimension_numbers = #tpu.dot_dimension_numbers<[1], [0], [0], [1], [0, 0, 1, 1], [], []>} : vector<8x32xbf16>, vector<32x32xbf16>, vector<8x32xf32> -> vector<8x32xf32>
    %c0_9 = arith.constant 0 : index
    %c0_10 = arith.constant 0 : index
    %12 = vector.load %arg5[%c0_9, %c0_10] : memref<1x32xf32, #tpu.memory_space<vmem>>, vector<1x32xf32>
    %13 = vector.broadcast %12 : vector<1x32xf32> to vector<8x32xf32>
    %14 = arith.addf %11, %13 : vector<8x32xf32>
    %cst_11 = arith.constant 0.000000e+00 : f32
    %15 = vector.broadcast %cst_11 : f32 to vector<8x32xf32>
    %16 = arith.maximumf %14, %15 : vector<8x32xf32>
    %17 = arith.truncf %16 : vector<8x32xf32> to vector<8x32xbf16>
    %c0_12 = arith.constant 0 : index
    %c0_13 = arith.constant 0 : index
    %18 = vector.load %arg6[%c0_12, %c0_13] : memref<32x64xbf16, #tpu.memory_space<vmem>>, vector<32x64xbf16>
    %cst_14 = arith.constant dense<0.000000e+00> : vector<8x64xf32>
    %19 = tpu.matmul %17, %18, %cst_14 {dimension_numbers = #tpu.dot_dimension_numbers<[1], [0], [0], [1], [0, 0, 1, 1], [], []>} : vector<8x32xbf16>, vector<32x64xbf16>, vector<8x64xf32> -> vector<8x64xf32>
    %c0_15 = arith.constant 0 : index
    %c0_16 = arith.constant 0 : index
    %20 = vector.load %arg7[%c0_15, %c0_16] : memref<1x64xf32, #tpu.memory_space<vmem>>, vector<1x64xf32>
    %21 = vector.broadcast %20 : vector<1x64xf32> to vector<8x64xf32>
    %22 = arith.addf %19, %21 : vector<8x64xf32>
    %cst_17 = arith.constant 0.000000e+00 : f32
    %23 = vector.broadcast %cst_17 : f32 to vector<8x64xf32>
    %24 = arith.subf %23, %22 : vector<8x64xf32>
    %25 = math.exp %24 : vector<8x64xf32>
    %cst_18 = arith.constant 1.000000e+00 : f32
    %26 = vector.broadcast %cst_18 : f32 to vector<8x64xf32>
    %27 = arith.addf %26, %25 : vector<8x64xf32>
    %28 = tpu.reciprocal %27 {approx = true} : vector<8x64xf32> -> vector<8x64xf32>
    %c0_19 = arith.constant 0 : index
    %c0_20 = arith.constant 0 : index
    %29 = vector.load %arg8[%c0_19, %c0_20] : memref<8x64xf32, #tpu.memory_space<vmem>>, vector<8x64xf32>
    tpu.vector_store %arg8[%c0_19, %c0_20], %28 {strides = array<i32>} : memref<8x64xf32, #tpu.memory_space<vmem>>, vector<8x64xf32>,
    return
  }
  func.func @transform_0(%arg0: i32) -> (i32, i32) {
    %c0_i32 = arith.constant 0 : i32
    %c0_i32_0 = arith.constant 0 : i32
    return %arg0, %c0_i32 : i32, i32
  }
  func.func @transform_1(%arg0: i32) -> (i32, i32) {
    %c0_i32 = arith.constant 0 : i32
    %c0_i32_0 = arith.constant 0 : i32
    %c0_i32_1 = arith.constant 0 : i32
    return %c0_i32, %c0_i32_0 : i32, i32
  }
  func.func @transform_2(%arg0: i32) -> (i32, i32) {
    %c0_i32 = arith.constant 0 : i32
    %c0_i32_0 = arith.constant 0 : i32
    %c0_i32_1 = arith.constant 0 : i32
    return %c0_i32, %c0_i32_0 : i32, i32
  }
  func.func @transform_3(%arg0: i32) -> (i32, i32) {
    %c0_i32 = arith.constant 0 : i32
    %c0_i32_0 = arith.constant 0 : i32
    %c0_i32_1 = arith.constant 0 : i32
    return %c0_i32, %c0_i32_0 : i32, i32
  }
  func.func @transform_4(%arg0: i32) -> (i32, i32) {
    %c0_i32 = arith.constant 0 : i32
    %c0_i32_0 = arith.constant 0 : i32
    %c0_i32_1 = arith.constant 0 : i32
    return %c0_i32, %c0_i32_0 : i32, i32
  }
  func.func @transform_5(%arg0: i32) -> (i32, i32) {
    %c0_i32 = arith.constant 0 : i32
    %c0_i32_0 = arith.constant 0 : i32
    %c0_i32_1 = arith.constant 0 : i32
    return %c0_i32, %c0_i32_0 : i32, i32
  }
  func.func @transform_6(%arg0: i32) -> (i32, i32) {
    %c0_i32 = arith.constant 0 : i32
    %c0_i32_0 = arith.constant 0 : i32
    %c0_i32_1 = arith.constant 0 : i32
    return %c0_i32, %c0_i32_0 : i32, i32
  }
  func.func @transform_7(%arg0: i32) -> (i32, i32) {
    %c0_i32 = arith.constant 0 : i32
    %c0_i32_0 = arith.constant 0 : i32
    return %arg0, %c0_i32 : i32, i32
  }
}

</mosaic_0001>

<llo_original>
// kernel: tpu_custom_call.1
$region0: #{tpu_custom_call.1}
  #allocation0 [shape = 'u32[]', space=smem, size = 0x4, offset = 0x4, fixed_abs, tag = 'smem constant byte address 0x4 - core index']
  #allocation1 [shape = 'u32[144,128]{1,0:T(1,128)}', space=vmem, size = 0x12000, scoped, tag = 'internal scratch']
  %s0 = inlined_call_operand.hbm [shape: f32[8,6], index: 0, kind: input, shape index: {}]
  %s1 = inlined_call_operand.hbm [shape: bf16[6,32], index: 1, kind: input, shape index: {}]
  %s2 = inlined_call_operand.vmem [shape: f32[1,32], index: 2, kind: input, shape index: {}]
  %s3 = inlined_call_operand.hbm [shape: bf16[32,32], index: 3, kind: input, shape index: {}]
  %s4 = inlined_call_operand.vmem [shape: f32[1,32], index: 4, kind: input, shape index: {}]
  %s5 = inlined_call_operand.hbm [shape: bf16[32,64], index: 5, kind: input, shape index: {}]
  %s6 = inlined_call_operand.vmem [shape: f32[1,64], index: 6, kind: input, shape index: {}]
  %s7 = inlined_call_operand.hbm [shape: f32[8,64], index: 7, kind: output, shape index: {}]
  %s8 = sld [smem:[#allocation0]]
  $region54: #{tpu_custom_call.1} parent=0
    _
  %s10 = ssub.s32 1, %s8
  %s11 = scalar_select 0, %s10, %s8
  $region1: #{tpu_custom_call.1} parent=0
    #allocation2 [shape = 'u8[4096]{0}', space=vmem, size = 0x1000, scoped, tag = 'input window, operand 0, single buffered']
    #allocation3 [shape = 's32[1]{0}', space=sflag, size = 0x4, scoped, tag = 'scoped memory for tpu_custom_call.1']
    #allocation4 [shape = 's32[1]{0}', space=sflag, size = 0x4, scoped, tag = 'scoped memory for tpu_custom_call.1']
    #allocation5 [shape = 'u8[2048]{0}', space=vmem, size = 0x800, scoped, tag = 'input window, operand 1, single buffered']
    #allocation6 [shape = 's32[1]{0}', space=sflag, size = 0x4, scoped, tag = 'scoped memory for tpu_custom_call.1']
    #allocation7 [shape = 'u8[8192]{0}', space=vmem, size = 0x2000, scoped, tag = 'input window, operand 3, single buffered']
    #allocation8 [shape = 'u8[8192]{0}', space=vmem, size = 0x2000, scoped, tag = 'input window, operand 5, single buffered']
    #allocation9 [shape = 's32[1]{0}', space=sflag, size = 0x4, scoped, tag = 'scoped memory for tpu_custom_call.1']
    #allocation10 [shape = 'u8[4096]{0}', space=vmem, size = 0x1000, scoped, tag = 'output window, operand 0, single buffered']
    %12 = vsyncpa [#allocation3], 0
    %13 = vsyncpa [#allocation6], 0
    %14 = vsyncpa [#allocation9], 0
    %15 = vsyncpa [#allocation4], 0
    // Predicated region
    $region2: #{tpu_custom_call.1} parent=1 // pred_check
      _
    $region3: #{tpu_custom_call.1} parent=1 // pred_check_branch
      %17 = sbr.rel (0) target = $region5
    $region4: #{tpu_custom_call.1} parent=1 // pred_region
      %s19 = ssub.s32 128, 128
      %20 = vsyncadd [#allocation3], %s19
      %s22 = sshll.u32 [#allocation2], 4
      %s23 = int_to_ptr.vmem [resolvable:$true] %s22
      %25 = dma.hbm_to_vmem [thread:$0]  %s0, 128, %s23, [#allocation3]
    $region5: #{tpu_custom_call.1} parent=1 // pred_fallthru
      _
    // Predicated region
    $region6: #{tpu_custom_call.1} parent=1 // pred_check
      _
    $region7: #{tpu_custom_call.1} parent=1 // pred_check_branch
      %27 = sbr.rel (0) target = $region9
    $region8: #{tpu_custom_call.1} parent=1 // pred_region
      %s29 = ssub.s32 64, 64
      %30 = vsyncadd [#allocation6], %s29
      %s32 = sshll.u32 [#allocation5], 4
      %s33 = int_to_ptr.vmem [resolvable:$true] %s32
      %35 = dma.hbm_to_vmem [thread:$0]  %s1, 64, %s33, [#allocation6]
    $region9: #{tpu_custom_call.1} parent=1 // pred_fallthru
      _
    // Predicated region
    $region10: #{tpu_custom_call.1} parent=1 // pred_check
      _
    $region11: #{tpu_custom_call.1} parent=1 // pred_check_branch
      %37 = sbr.rel (0) target = $region13
    $region12: #{tpu_custom_call.1} parent=1 // pred_region
      _
    $region13: #{tpu_custom_call.1} parent=1 // pred_fallthru
      _
    // Predicated region
    $region14: #{tpu_custom_call.1} parent=1 // pred_check
      _
    $region15: #{tpu_custom_call.1} parent=1 // pred_check_branch
      %39 = sbr.rel (0) target = $region17
    $region16: #{tpu_custom_call.1} parent=1 // pred_region
      %s41 = ssub.s32 256, 256
      %42 = vsyncadd [#allocation6], %s41
      %s43 = sshll.u32 [#allocation7], 4
      %s44 = int_to_ptr.vmem [resolvable:$true] %s43
      %49 = dma.hbm_to_vmem [thread:$0]  %s3, 256, %s44, [#allocation6], 64, 64, 4
    $region17: #{tpu_custom_call.1} parent=1 // pred_fallthru
      _
    // Predicated region
    $region18: #{tpu_custom_call.1} parent=1 // pred_check
      _
    $region19: #{tpu_custom_call.1} parent=1 // pred_check_branch
      %51 = sbr.rel (0) target = $region21
    $region20: #{tpu_custom_call.1} parent=1 // pred_region
      _
    $region21: #{tpu_custom_call.1} parent=1 // pred_fallthru
      _
    // Predicated region
    $region22: #{tpu_custom_call.1} parent=1 // pred_check
      _
    $region23: #{tpu_custom_call.1} parent=1 // pred_check_branch
      %53 = sbr.rel (0) target = $region25
    $region24: #{tpu_custom_call.1} parent=1 // pred_region
      %s55 = ssub.s32 256, 256
      %56 = vsyncadd [#allocation9], %s55
      %s57 = sshll.u32 [#allocation8], 4
      %s58 = int_to_ptr.vmem [resolvable:$true] %s57
      %63 = dma.hbm_to_vmem [thread:$0]  %s5, 256, %s58, [#allocation9], 64, 64, 4
    $region25: #{tpu_custom_call.1} parent=1 // pred_fallthru
      _
    // Predicated region
    $region26: #{tpu_custom_call.1} parent=1 // pred_check
      _
    $region27: #{tpu_custom_call.1} parent=1 // pred_check_branch
      %65 = sbr.rel (0) target = $region29
    $region28: #{tpu_custom_call.1} parent=1 // pred_region
      _
    $region29: #{tpu_custom_call.1} parent=1 // pred_fallthru
      _
    // Predicated region
    $region30: #{tpu_custom_call.1} parent=1 // pred_check
      _
    $region31: #{tpu_custom_call.1} parent=1 // pred_check_branch
      %67 = sbr.rel (0) target = $region33
    $region32: #{tpu_custom_call.1} parent=1 // pred_region
      %68 = dma.done [#allocation3], 128
    $region33: #{tpu_custom_call.1} parent=1 // pred_fallthru
      _
    // Predicated region
    $region34: #{tpu_custom_call.1} parent=1 // pred_check
      _
    $region35: #{tpu_custom_call.1} parent=1 // pred_check_branch
      %70 = sbr.rel (0) target = $region37
    $region36: #{tpu_custom_call.1} parent=1 // pred_region
      %71 = dma.done [#allocation6], 64
    $region37: #{tpu_custom_call.1} parent=1 // pred_fallthru
      _
    // Predicated region
    $region38: #{tpu_custom_call.1} parent=1 // pred_check
      _
    $region39: #{tpu_custom_call.1} parent=1 // pred_check_branch
      %73 = sbr.rel (0) target = $region41
    $region40: #{tpu_custom_call.1} parent=1 // pred_region
      %74 = dma.done [#allocation6], 256
    $region41: #{tpu_custom_call.1} parent=1 // pred_fallthru
      _
    // Predicated region
    $region42: #{tpu_custom_call.1} parent=1 // pred_check
      _
    $region43: #{tpu_custom_call.1} parent=1 // pred_check_branch
      %76 = sbr.rel (0) target = $region45
    $region44: #{tpu_custom_call.1} parent=1 // pred_region
      %77 = dma.done [#allocation9], 256
    $region45: #{tpu_custom_call.1} parent=1 // pred_fallthru
      _
    %v79 = vld [vmem:[#allocation2] sm:$0xff]
    %v80 = vpack.c.bf16 %v79, %v79
    %v81 = vld [vmem:[#allocation5] sm:$0x7]
    %v82 = vld [vmem:[%s2] sm:$0x1]
    %v84 = vlaneseq
    %v85 = vshrl.u32 %v84, 7
    %v86 = vsub.s32 0, %v85
    %v87 = vrot.slane %v82, %v86
    %vm89 = vcmask 48128
    %v91 = vsel %vm89, %v80, 0
    %vm93 = vcmask 1042432
    %v95 = vsel %vm93, %v81, 0
    %97 = vmatprep.subr.bf16.mxu0 0
    %98 = vmatpush1.bf16.msra.mxu0 0
    %99 = vmatprep.subr.bf16.mxu0 0
    %100 = vmatpush1.bf16.msra.mxu0 0
    %101 = vmatprep.subr.bf16.mxu0 0
    %102 = vmatpush1.bf16.msra.mxu0 0
    %103 = vmatprep.subr.bf16.mxu0 0
    %104 = vmatpush1.bf16.msra.mxu0 0
    %105 = vmatprep.subr.bf16.mxu0 0
    %106 = vmatpush1.bf16.msra.mxu0 0
    %107 = vmatprep.subr.bf16.mxu0 0
    %108 = vmatpush1.bf16.msra.mxu0 0
    %109 = vmatprep.subr.bf16.mxu0 0
    %110 = vmatpush1.bf16.msra.mxu0 0
    %111 = vmatprep.subr.bf16.mxu0 0
    %112 = vmatpush1.bf16.msra.mxu0 %v95
    %113 = vmatprep.subr.bf16.mxu0 0
    %114 = vmatpush2.bf16.msra.mxu0 0
    %115 = vmatprep.subr.bf16.mxu0 0
    %116 = vmatpush2.bf16.msra.mxu0 0
    %117 = vmatprep.subr.bf16.mxu0 0
    %118 = vmatpush2.bf16.msra.mxu0 0
    %119 = vmatprep.subr.bf16.mxu0 0
    %120 = vmatpush2.bf16.msra.mxu0 0
    %121 = vmatprep.subr.bf16.mxu0 0
    %122 = vmatpush2.bf16.msra.mxu0 0
    %123 = vmatprep.subr.bf16.mxu0 0
    %124 = vmatpush2.bf16.msra.mxu0 0
    %125 = vmatprep.subr.bf16.mxu0 0
    %126 = vmatpush2.bf16.msra.mxu0 0
    %127 = vmatprep.subr.bf16.mxu0 0
    %128 = vmatpush2.bf16.msra.mxu0 0
    %129 = vmatprep.mubr.bf16.mxu0 0
    %130 = vmatmul.mubr.bf16.gmra.mxu0 %v91
    %v131 = vpop.f32.mrf.mxu0
    %v132 = vadd.f32 %v87, %v131
    %v133 = vpop.f32.mrf.mxu0
    %v134 = vpop.f32.mrf.mxu0
    %v135 = vpop.f32.mrf.mxu0
    %136 = vdwg.mxu0
    %v137 = vmax.f32 %v132, 0.0
    %v138 = vpack.c.bf16 %v137, %v137
    %v139 = vld [vmem:[#allocation7] sm:$0xf]
    %v140 = vld [vmem:[#allocation7 + $0x4] sm:$0xf]
    %v141 = vld [vmem:[#allocation7 + $0x8] sm:$0xf]
    %v142 = vld [vmem:[#allocation7 + $0xc] sm:$0xf]
    %v143 = vld [vmem:[%s4] sm:$0x1]
    %v145 = vlaneseq
    %v146 = vshrl.u32 %v145, 7
    %v147 = vsub.s32 0, %v146
    %v148 = vrot.slane %v143, %v147
    %v154 = vunpack.c.l.b16 %v139
    %v155 = vunpack.c.l.b16 %v140
    %v156 = vunpack.c.l.b16 %v141
    %v157 = vunpack.c.l.b16 %v142
    %v158 = vpack.c.b16 %v155, %v154
    %v159 = vpack.c.b16 %v157, %v156
    %vm162 = vcmask 261120
    %v164 = vsel %vm162, %v138, 0
    %166 = vmatprep.subr.bf16.mxu0 0
    %167 = vmatpush1.bf16.msra.mxu0 0
    %168 = vmatprep.subr.bf16.mxu0 0
    %169 = vmatpush1.bf16.msra.mxu0 0
    %170 = vmatprep.subr.bf16.mxu0 0
    %171 = vmatpush1.bf16.msra.mxu0 0
    %172 = vmatprep.subr.bf16.mxu0 0
    %173 = vmatpush1.bf16.msra.mxu0 0
    %174 = vmatprep.subr.bf16.mxu0 0
    %175 = vmatpush1.bf16.msra.mxu0 0
    %176 = vmatprep.subr.bf16.mxu0 0
    %177 = vmatpush1.bf16.msra.mxu0 0
    %178 = vmatprep.subr.bf16.mxu0 0
    %179 = vmatpush1.bf16.msra.mxu0 %v159
    %180 = vmatprep.subr.bf16.mxu0 0
    %181 = vmatpush1.bf16.msra.mxu0 %v158
    %182 = vmatprep.subr.bf16.mxu0 0
    %183 = vmatpush2.bf16.msra.mxu0 0
    %184 = vmatprep.subr.bf16.mxu0 0
    %185 = vmatpush2.bf16.msra.mxu0 0
    %186 = vmatprep.subr.bf16.mxu0 0
    %187 = vmatpush2.bf16.msra.mxu0 0
    %188 = vmatprep.subr.bf16.mxu0 0
    %189 = vmatpush2.bf16.msra.mxu0 0
    %190 = vmatprep.subr.bf16.mxu0 0
    %191 = vmatpush2.bf16.msra.mxu0 0
    %192 = vmatprep.subr.bf16.mxu0 0
    %193 = vmatpush2.bf16.msra.mxu0 0
    %194 = vmatprep.subr.bf16.mxu0 0
    %195 = vmatpush2.bf16.msra.mxu0 0
    %196 = vmatprep.subr.bf16.mxu0 0
    %197 = vmatpush2.bf16.msra.mxu0 0
    %198 = vmatprep.mubr.bf16.mxu0 0
    %199 = vmatmul.mubr.bf16.gmra.mxu0 %v164
    %v200 = vpop.f32.mrf.mxu0
    %v201 = vadd.f32 %v148, %v200
    %v202 = vpop.f32.mrf.mxu0
    %v203 = vpop.f32.mrf.mxu0
    %v204 = vpop.f32.mrf.mxu0
    %205 = vdwg.mxu0
    %v206 = vmax.f32 %v201, 0.0
    %v207 = vpack.c.bf16 %v206, %v206
    %v208 = vld [vmem:[#allocation8] sm:$0xf]
    %v209 = vld [vmem:[#allocation8 + $0x4] sm:$0xf]
    %v210 = vld [vmem:[#allocation8 + $0x8] sm:$0xf]
    %v211 = vld [vmem:[#allocation8 + $0xc] sm:$0xf]
    %v212 = vld [vmem:[%s6] sm:$0x1]
    %v214 = vlaneseq
    %v215 = vshrl.u32 %v214, 7
    %v216 = vsub.s32 0, %v215
    %v217 = vrot.slane %v212, %v216
    %v223 = vunpack.c.l.b16 %v208
    %v224 = vunpack.c.l.b16 %v209
    %v225 = vunpack.c.l.b16 %v210
    %v226 = vunpack.c.l.b16 %v211
    %v227 = vpack.c.b16 %v224, %v223
    %v228 = vpack.c.b16 %v226, %v225
    %v232 = vsel %vm162, %v207, 0
    %234 = vmatprep.subr.bf16.mxu0 0
    %235 = vmatpush1.bf16.msra.mxu0 0
    %236 = vmatprep.subr.bf16.mxu0 0
    %237 = vmatpush1.bf16.msra.mxu0 0
    %238 = vmatprep.subr.bf16.mxu0 0
    %239 = vmatpush1.bf16.msra.mxu0 0
    %240 = vmatprep.subr.bf16.mxu0 0
    %241 = vmatpush1.bf16.msra.mxu0 0
    %242 = vmatprep.subr.bf16.mxu0 0
    %243 = vmatpush1.bf16.msra.mxu0 0
    %244 = vmatprep.subr.bf16.mxu0 0
    %245 = vmatpush1.bf16.msra.mxu0 0
    %246 = vmatprep.subr.bf16.mxu0 0
    %247 = vmatpush1.bf16.msra.mxu0 %v228
    %248 = vmatprep.subr.bf16.mxu0 0
    %249 = vmatpush1.bf16.msra.mxu0 %v227
    %250 = vmatprep.subr.bf16.mxu0 0
    %251 = vmatpush2.bf16.msra.mxu0 0
    %252 = vmatprep.subr.bf16.mxu0 0
    %253 = vmatpush2.bf16.msra.mxu0 0
    %254 = vmatprep.subr.bf16.mxu0 0
    %255 = vmatpush2.bf16.msra.mxu0 0
    %256 = vmatprep.subr.bf16.mxu0 0
    %257 = vmatpush2.bf16.msra.mxu0 0
    %258 = vmatprep.subr.bf16.mxu0 0
    %259 = vmatpush2.bf16.msra.mxu0 0
    %260 = vmatprep.subr.bf16.mxu0 0
    %261 = vmatpush2.bf16.msra.mxu0 0
    %262 = vmatprep.subr.bf16.mxu0 0
    %263 = vmatpush2.bf16.msra.mxu0 0
    %264 = vmatprep.subr.bf16.mxu0 0
    %265 = vmatpush2.bf16.msra.mxu0 0
    %266 = vmatprep.mubr.bf16.mxu0 0
    %267 = vmatmul.mubr.bf16.gmra.mxu0 %v232
    %v268 = vpop.f32.mrf.mxu0
    %v269 = vadd.f32 %v217, %v268
    %v270 = vpop.f32.mrf.mxu0
    %v271 = vpop.f32.mrf.mxu0
    %v272 = vpop.f32.mrf.mxu0
    %273 = vdwg.mxu0
    %v274 = vsub.f32 0.0, %v269
    %v275 = vmul.f32 %v274, 1.442695
    %v276 = vpow.pop %v275
    %v277 = vadd.f32 %v276, 1.0
    %v278 = vrcp.pop %v277
    %vm279 = vcmask 523264
    %280 = vst.msk [vmem:[#allocation10] sm:$0xff] %vm279, %v278
    // Predicated region
    $region46: #{tpu_custom_call.1} parent=1 // pred_check
      _
    $region47: #{tpu_custom_call.1} parent=1 // pred_check_branch
      %282 = sbr.rel (0) target = $region49
    $region48: #{tpu_custom_call.1} parent=1 // pred_region
      %s284 = ssub.s32 128, 128
      %285 = vsyncadd [#allocation4], %s284
      %s287 = sshll.u32 [#allocation10], 4
      %s288 = int_to_ptr.vmem [resolvable:$true] %s287
      %290 = dma.vmem_to_hbm [thread:$0]  %s288, 128, %s7, [#allocation4]
    $region49: #{tpu_custom_call.1} parent=1 // pred_fallthru
      _
    // Predicated region
    $region50: #{tpu_custom_call.1} parent=1 // pred_check
      _
    $region51: #{tpu_custom_call.1} parent=1 // pred_check_branch
      %292 = sbr.rel (0) target = $region53
    $region52: #{tpu_custom_call.1} parent=1 // pred_region
      %293 = dma.done [#allocation4], 128
    $region53: #{tpu_custom_call.1} parent=1 // pred_fallthru
      _
    %294 = vsyncpa [#allocation3], 1
    %295 = vsyncpa [#allocation6], 1
    %296 = vsyncpa [#allocation9], 1
    %297 = vsyncpa [#allocation4], 1

</llo_original>
